<compile_context>
chip_gen: v6e
topology: v6e:2x2x1
jax: 0.10.0
libtpu: 0.0.40
codegen_flags: <defaults>
</compile_context>

<pallas_src>
import functools

import jax
import jax.numpy as jnp
from jax.experimental import pallas as pl
from jax.experimental.pallas import tpu as pltpu


def _mlp2_kernel(x_ref, w1_ref, b1_ref, w2_ref, b2_ref, o_ref):
    """relu(x @ W1 + b1) @ W2 + b2   (W2/b2 may be the folded fc2@out pair).

    x_ref : (tb, IN)    f32  activations (streamed per grid step)
    w1_ref: (IN, H)     bf16 resident (constant block index across the grid)
    b1_ref: (1, H)      f32  resident
    w2_ref: (H, OUTD)   bf16 resident
    b2_ref: (1, OUTD)   f32  resident
    o_ref : (tb, OUTD)  f32
    """
    x = x_ref[...].astype(jnp.bfloat16)
    h1 = jnp.dot(x, w1_ref[...], preferred_element_type=jnp.float32) + b1_ref[...]
    h1 = jnp.maximum(h1, 0.0)                                       # relu1 (f32 VPU)
    y = jnp.dot(h1.astype(jnp.bfloat16), w2_ref[...],
                preferred_element_type=jnp.float32) + b2_ref[...]
    o_ref[...] = y.astype(o_ref.dtype)


def prepare_params(params, self_supervised=True):
    """One-time weight prep (run once, outside the per-call hot path).

    Transposes PyTorch (out, in) weights to (in, out), casts them to bf16,
    and — for the self_supervised=True path — folds fc2 and `out` into a
    single (H, OUT) matrix + bias.  Biases stay f32.
    """
    w1, b1, w2, b2, w3, b3 = params
    H = w1.shape[0]
    w1_t = w1.T.astype(jnp.bfloat16)                       # (IN, H)
    b1_r = b1.reshape(1, H).astype(jnp.float32)            # (1, H)
    if self_supervised:
        OUT = w3.shape[0]
        w23 = (w2.T.astype(jnp.float32) @ w3.T.astype(jnp.float32))
        w23 = w23.astype(jnp.bfloat16)                     # (H, OUT)
        b23 = (b2 @ w3.T + b3).reshape(1, OUT).astype(jnp.float32)
        return (w1_t, b1_r, w23, b23)
    w2_t = w2.T.astype(jnp.bfloat16)                       # (H, H)
    b2_r = b2.reshape(1, H).astype(jnp.float32)            # (1, H)
    return (w1_t, b1_r, w2_t, b2_r)


@functools.partial(jax.jit, static_argnames=("batch_tile",))
def net_forward(x, prepared, batch_tile=512):
    """Pallas forward. x: (B, IN) f32; `prepared` from prepare_params()."""
    w1_t, b1_r, w2_t, b2_r = prepared
    B, IN = x.shape
    H = w1_t.shape[1]
    OUTD = w2_t.shape[1]

    # Batch tiling: small batches run in a single grid step (block == full
    # array, so no (8,128) divisibility requirement); large batches are
    # streamed in batch_tile-row chunks while weights stay VMEM-resident.
    tb = B if B <= batch_tile else batch_tile
    pad = (-B) % tb
    if pad:
        x = jnp.pad(x, ((0, pad), (0, 0)))
    Bp = B + pad
    grid = (Bp // tb,)

    cost = pl.CostEstimate(
        flops=2 * Bp * IN * H + 2 * Bp * H * OUTD + 2 * Bp * H + Bp * OUTD,
        transcendentals=0,
        bytes_accessed=(Bp * IN * 4 + IN * H * 2 + H * 4
                        + H * OUTD * 2 + OUTD * 4 + Bp * OUTD * 4),
    )

    y = pl.pallas_call(
        _mlp2_kernel,
        out_shape=jax.ShapeDtypeStruct((Bp, OUTD), jnp.float32),
        grid=grid,
        in_specs=[
            pl.BlockSpec((tb, IN), lambda i: (i, 0)),     # x: streamed
            pl.BlockSpec((IN, H), lambda i: (0, 0)),      # W1: resident
            pl.BlockSpec((1, H), lambda i: (0, 0)),       # b1: resident
            pl.BlockSpec((H, OUTD), lambda i: (0, 0)),    # W2 / W23: resident
            pl.BlockSpec((1, OUTD), lambda i: (0, 0)),    # b2 / b23: resident
        ],
        out_specs=pl.BlockSpec((tb, OUTD), lambda i: (i, 0)),
        compiler_params=pltpu.CompilerParams(
            dimension_semantics=("parallel",)),           # shards batch across v7x TCs
        cost_estimate=cost,
    )(x, w1_t, b1_r, w2_t, b2_r)

    if pad:
        y = y[:B]
    return y


def init_params(key, in_features=32, hidden=64, out_features=16):
    ks = jax.random.split(key, 6)

    def lin(kw, kb, fan_in, fan_out):
        bound = 1.0 / jnp.sqrt(fan_in)
        w = jax.random.uniform(kw, (fan_out, fan_in), jnp.float32, -bound, bound)
        b = jax.random.uniform(kb, (fan_out,), jnp.float32, -bound, bound)
        return w, b

    w1, b1 = lin(ks[0], ks[1], in_features, hidden)
    w2, b2 = lin(ks[2], ks[3], hidden, hidden)
    w3, b3 = lin(ks[4], ks[5], hidden, out_features)
    return (w1, b1, w2, b2, w3, b3)


def reference_forward(x, params, self_supervised=True):
    w1, b1, w2, b2, w3, b3 = params
    h1 = jnp.maximum(x @ w1.T + b1, 0.0)
    h2 = h1 @ w2.T + b2
    if self_supervised:
        return h2 @ w3.T + b3
    return h2


if __name__ == "__main__":
    key = jax.random.PRNGKey(0)
    kx, kp = jax.random.split(key)

    B, IN, H, OUT = 8, 32, 64, 16
    x = jax.random.normal(kx, (B, IN), jnp.float32)
    params = init_params(kp, IN, H, OUT)

    # self_supervised=True path: fc1 -> relu -> (fc2 folded with out)
    prep_ss = prepare_params(params, self_supervised=True)
    y = jax.block_until_ready(net_forward(x, prep_ss))
    y_ref = reference_forward(x, params, self_supervised=True)
    assert y.shape == (B, OUT), y.shape
    assert jnp.allclose(y, y_ref, atol=3e-2, rtol=3e-2), "mismatch (self_supervised=True)"

    # self_supervised=False path: fc1 -> relu -> fc2 (returns hidden (B, H))
    prep_h = prepare_params(params, self_supervised=False)
    y2 = jax.block_until_ready(net_forward(x, prep_h))
    y2_ref = reference_forward(x, params, self_supervised=False)
    assert y2.shape == (B, H), y2.shape
    assert jnp.allclose(y2, y2_ref, atol=3e-2, rtol=3e-2), "mismatch (self_supervised=False)"

    print("KERNEL_OK")
</pallas_src>

<mosaic_0001>
module attributes {stable_mosaic.version = 11 : i64} {
  func.func @_mlp2_kernel(%arg0: i32, %arg1: memref<8x32xf32, #tpu.memory_space<vmem>>, %arg2: memref<32x64xbf16, #tpu.memory_space<vmem>>, %arg3: memref<1x64xf32, #tpu.memory_space<vmem>>, %arg4: memref<64x16xbf16, #tpu.memory_space<vmem>>, %arg5: memref<1x16xf32, #tpu.memory_space<vmem>>, %arg6: memref<8x16xf32, #tpu.memory_space<vmem>>) attributes {dimension_semantics = [#tpu.dimension_semantics<parallel>], iteration_bounds = array<i64: 1>, scalar_prefetch = 0 : i64, scratch_operands = 0 : i64, tpu.core_type = #tpu.core_type<tc>, window_params = [{transform_indices = @transform_0, window_bounds = array<i64: 8, 32>}, {pipeline_mode = #tpu.pipeline_mode<synchronous>, transform_indices = @transform_1, window_bounds = array<i64: 32, 64>}, {pipeline_mode = #tpu.pipeline_mode<synchronous>, transform_indices = @transform_2, window_bounds = array<i64: 1, 64>}, {pipeline_mode = #tpu.pipeline_mode<synchronous>, transform_indices = @transform_3, window_bounds = array<i64: 64, 16>}, {pipeline_mode = #tpu.pipeline_mode<synchronous>, transform_indices = @transform_4, window_bounds = array<i64: 1, 16>}, {transform_indices = @transform_5, window_bounds = array<i64: 8, 16>}]} {
    %c0 = arith.constant 0 : index
    %c0_0 = arith.constant 0 : index
    %0 = vector.load %arg1[%c0, %c0_0] : memref<8x32xf32, #tpu.memory_space<vmem>>, vector<8x32xf32>
    %1 = arith.truncf %0 : vector<8x32xf32> to vector<8x32xbf16>
    %c0_1 = arith.constant 0 : index
    %c0_2 = arith.constant 0 : index
    %2 = vector.load %arg2[%c0_1, %c0_2] : memref<32x64xbf16, #tpu.memory_space<vmem>>, vector<32x64xbf16>
    %cst = arith.constant dense<0.000000e+00> : vector<8x64xf32>
    %3 = tpu.matmul %1, %2, %cst {dimension_numbers = #tpu.dot_dimension_numbers<[1], [0], [0], [1], [0, 0, 1, 1], [], []>} : vector<8x32xbf16>, vector<32x64xbf16>, vector<8x64xf32> -> vector<8x64xf32>
    %c0_3 = arith.constant 0 : index
    %c0_4 = arith.constant 0 : index
    %4 = vector.load %arg3[%c0_3, %c0_4] : memref<1x64xf32, #tpu.memory_space<vmem>>, vector<1x64xf32>
    %5 = vector.broadcast %4 : vector<1x64xf32> to vector<8x64xf32>
    %6 = arith.addf %3, %5 : vector<8x64xf32>
    %cst_5 = arith.constant 0.000000e+00 : f32
    %7 = vector.broadcast %cst_5 : f32 to vector<8x64xf32>
    %8 = arith.maximumf %6, %7 : vector<8x64xf32>
    %9 = arith.truncf %8 : vector<8x64xf32> to vector<8x64xbf16>
    %c0_6 = arith.constant 0 : index
    %c0_7 = arith.constant 0 : index
    %10 = vector.load %arg4[%c0_6, %c0_7] : memref<64x16xbf16, #tpu.memory_space<vmem>>, vector<64x16xbf16>
    %cst_8 = arith.constant dense<0.000000e+00> : vector<8x16xf32>
    %11 = tpu.matmul %9, %10, %cst_8 {dimension_numbers = #tpu.dot_dimension_numbers<[1], [0], [0], [1], [0, 0, 1, 1], [], []>} : vector<8x64xbf16>, vector<64x16xbf16>, vector<8x16xf32> -> vector<8x16xf32>
    %c0_9 = arith.constant 0 : index
    %c0_10 = arith.constant 0 : index
    %12 = vector.load %arg5[%c0_9, %c0_10] : memref<1x16xf32, #tpu.memory_space<vmem>>, vector<1x16xf32>
    %13 = vector.broadcast %12 : vector<1x16xf32> to vector<8x16xf32>
    %14 = arith.addf %11, %13 : vector<8x16xf32>
    %c0_11 = arith.constant 0 : index
    %c0_12 = arith.constant 0 : index
    %15 = vector.load %arg6[%c0_11, %c0_12] : memref<8x16xf32, #tpu.memory_space<vmem>>, vector<8x16xf32>
    tpu.vector_store %arg6[%c0_11, %c0_12], %14 {strides = array<i32>} : memref<8x16xf32, #tpu.memory_space<vmem>>, vector<8x16xf32>,
    return
  }
  func.func @transform_0(%arg0: i32) -> (i32, i32) {
    %c0_i32 = arith.constant 0 : i32
    %c0_i32_0 = arith.constant 0 : i32
    return %arg0, %c0_i32 : i32, i32
  }
  func.func @transform_1(%arg0: i32) -> (i32, i32) {
    %c0_i32 = arith.constant 0 : i32
    %c0_i32_0 = arith.constant 0 : i32
    %c0_i32_1 = arith.constant 0 : i32
    return %c0_i32, %c0_i32_0 : i32, i32
  }
  func.func @transform_2(%arg0: i32) -> (i32, i32) {
    %c0_i32 = arith.constant 0 : i32
    %c0_i32_0 = arith.constant 0 : i32
    %c0_i32_1 = arith.constant 0 : i32
    return %c0_i32, %c0_i32_0 : i32, i32
  }
  func.func @transform_3(%arg0: i32) -> (i32, i32) {
    %c0_i32 = arith.constant 0 : i32
    %c0_i32_0 = arith.constant 0 : i32
    %c0_i32_1 = arith.constant 0 : i32
    return %c0_i32, %c0_i32_0 : i32, i32
  }
  func.func @transform_4(%arg0: i32) -> (i32, i32) {
    %c0_i32 = arith.constant 0 : i32
    %c0_i32_0 = arith.constant 0 : i32
    %c0_i32_1 = arith.constant 0 : i32
    return %c0_i32, %c0_i32_0 : i32, i32
  }
  func.func @transform_5(%arg0: i32) -> (i32, i32) {
    %c0_i32 = arith.constant 0 : i32
    %c0_i32_0 = arith.constant 0 : i32
    return %arg0, %c0_i32 : i32, i32
  }
}

</mosaic_0001>

<llo_original>
// kernel: net_forward.1
$region0: #{net_forward.1}
  #allocation0 [shape = 'u32[]', space=smem, size = 0x4, offset = 0x4, fixed_abs, tag = 'smem constant byte address 0x4 - core index']
  #allocation1 [shape = 'u32[144,128]{1,0:T(1,128)}', space=vmem, size = 0x12000, scoped, tag = 'internal scratch']
  %s0 = inlined_call_operand.vmem [shape: f32[8,32], index: 0, kind: input, shape index: {}]
  %s1 = inlined_call_operand.vmem [shape: bf16[32,64], index: 1, kind: input, shape index: {}]
  %s2 = inlined_call_operand.vmem [shape: f32[1,64], index: 2, kind: input, shape index: {}]
  %s3 = inlined_call_operand.vmem [shape: bf16[64,16], index: 3, kind: input, shape index: {}]
  %s4 = inlined_call_operand.vmem [shape: f32[1,16], index: 4, kind: input, shape index: {}]
  %s5 = inlined_call_operand.hbm [shape: f32[8,16], index: 5, kind: output, shape index: {}]
  %s6 = sld [smem:[#allocation0]]
  $region30: #{net_forward.1} parent=0
    _
  %s8 = ssub.s32 1, %s6
  %s9 = scalar_select 0, %s8, %s6
  $region1: #{net_forward.1} parent=0
    #allocation2 [shape = 'u8[4096]{0}', space=vmem, size = 0x1000, scoped, tag = 'output window, operand 0, single buffered']
    #allocation3 [shape = 's32[1]{0}', space=sflag, size = 0x4, scoped, tag = 'scoped memory for net_forward.1']
    %10 = vsyncpa [#allocation3], 0
    // Predicated region
    $region2: #{net_forward.1} parent=1 // pred_check
      _
    $region3: #{net_forward.1} parent=1 // pred_check_branch
      %12 = sbr.rel (0) target = $region5
    $region4: #{net_forward.1} parent=1 // pred_region
      _
    $region5: #{net_forward.1} parent=1 // pred_fallthru
      _
    // Predicated region
    $region6: #{net_forward.1} parent=1 // pred_check
      _
    $region7: #{net_forward.1} parent=1 // pred_check_branch
      %14 = sbr.rel (0) target = $region9
    $region8: #{net_forward.1} parent=1 // pred_region
      _
    $region9: #{net_forward.1} parent=1 // pred_fallthru
      _
    // Predicated region
    $region10: #{net_forward.1} parent=1 // pred_check
      _
    $region11: #{net_forward.1} parent=1 // pred_check_branch
      %16 = sbr.rel (0) target = $region13
    $region12: #{net_forward.1} parent=1 // pred_region
      _
    $region13: #{net_forward.1} parent=1 // pred_fallthru
      _
    // Predicated region
    $region14: #{net_forward.1} parent=1 // pred_check
      _
    $region15: #{net_forward.1} parent=1 // pred_check_branch
      %18 = sbr.rel (0) target = $region17
    $region16: #{net_forward.1} parent=1 // pred_region
      _
    $region17: #{net_forward.1} parent=1 // pred_fallthru
      _
    // Predicated region
    $region18: #{net_forward.1} parent=1 // pred_check
      _
    $region19: #{net_forward.1} parent=1 // pred_check_branch
      %20 = sbr.rel (0) target = $region21
    $region20: #{net_forward.1} parent=1 // pred_region
      _
    $region21: #{net_forward.1} parent=1 // pred_fallthru
      _
    %v22 = vld [vmem:[%s0] sm:$0xff]
    %v23 = vpack.c.bf16 %v22, %v22
    %v24 = vld [vmem:[%s1] sm:$0xf]
    %v25 = vld [vmem:[%s1 + $0x4] sm:$0xf]
    %v26 = vld [vmem:[%s1 + $0x8] sm:$0xf]
    %v27 = vld [vmem:[%s1 + $0xc] sm:$0xf]
    %v28 = vld [vmem:[%s2] sm:$0x1]
    %v30 = vlaneseq
    %v31 = vshrl.u32 %v30, 7
    %v32 = vsub.s32 0, %v31
    %v33 = vrot.slane %v28, %v32
    %v39 = vunpack.c.l.b16 %v24
    %v40 = vunpack.c.l.b16 %v25
    %v41 = vunpack.c.l.b16 %v26
    %v42 = vunpack.c.l.b16 %v27
    %v43 = vpack.c.b16 %v40, %v39
    %v44 = vpack.c.b16 %v42, %v41
    %vm47 = vcmask 261120
    %v49 = vsel %vm47, %v23, 0
    %51 = vmatprep.subr.bf16.mxu0 0
    %52 = vmatpush1.bf16.msra.mxu0 0
    %53 = vmatprep.subr.bf16.mxu0 0
    %54 = vmatpush1.bf16.msra.mxu0 0
    %55 = vmatprep.subr.bf16.mxu0 0
    %56 = vmatpush1.bf16.msra.mxu0 0
    %57 = vmatprep.subr.bf16.mxu0 0
    %58 = vmatpush1.bf16.msra.mxu0 0
    %59 = vmatprep.subr.bf16.mxu0 0
    %60 = vmatpush1.bf16.msra.mxu0 0
    %61 = vmatprep.subr.bf16.mxu0 0
    %62 = vmatpush1.bf16.msra.mxu0 0
    %63 = vmatprep.subr.bf16.mxu0 0
    %64 = vmatpush1.bf16.msra.mxu0 %v44
    %65 = vmatprep.subr.bf16.mxu0 0
    %66 = vmatpush1.bf16.msra.mxu0 %v43
    %67 = vmatprep.subr.bf16.mxu0 0
    %68 = vmatpush2.bf16.msra.mxu0 0
    %69 = vmatprep.subr.bf16.mxu0 0
    %70 = vmatpush2.bf16.msra.mxu0 0
    %71 = vmatprep.subr.bf16.mxu0 0
    %72 = vmatpush2.bf16.msra.mxu0 0
    %73 = vmatprep.subr.bf16.mxu0 0
    %74 = vmatpush2.bf16.msra.mxu0 0
    %75 = vmatprep.subr.bf16.mxu0 0
    %76 = vmatpush2.bf16.msra.mxu0 0
    %77 = vmatprep.subr.bf16.mxu0 0
    %78 = vmatpush2.bf16.msra.mxu0 0
    %79 = vmatprep.subr.bf16.mxu0 0
    %80 = vmatpush2.bf16.msra.mxu0 0
    %81 = vmatprep.subr.bf16.mxu0 0
    %82 = vmatpush2.bf16.msra.mxu0 0
    %83 = vmatprep.mubr.bf16.mxu0 0
    %84 = vmatmul.mubr.bf16.gmra.mxu0 %v49
    %v85 = vpop.f32.mrf.mxu0
    %v86 = vadd.f32 %v33, %v85
    %v87 = vpop.f32.mrf.mxu0
    %v88 = vpop.f32.mrf.mxu0
    %v89 = vpop.f32.mrf.mxu0
    %90 = vdwg.mxu0
    %v91 = vmax.f32 %v86, 0.0
    %v92 = vpack.c.bf16 %v91, %v91
    %v93 = vld [vmem:[%s3] sm:$0xf]
    %v94 = vld [vmem:[%s3 + $0x4] sm:$0xf]
    %v95 = vld [vmem:[%s3 + $0x8] sm:$0xf]
    %v96 = vld [vmem:[%s3 + $0xc] sm:$0xf]
    %v97 = vld [vmem:[%s3 + $0x10] sm:$0xf]
    %v98 = vld [vmem:[%s3 + $0x14] sm:$0xf]
    %v99 = vld [vmem:[%s3 + $0x18] sm:$0xf]
    %v100 = vld [vmem:[%s3 + $0x1c] sm:$0xf]
    %v101 = vld [vmem:[%s4] sm:$0x1]
    %v103 = vlaneseq
    %v104 = vshrl.u32 %v103, 7
    %v105 = vsub.s32 0, %v104
    %v106 = vrot.slane %v101, %v105
    %v116 = vunpack.c.l.b16 %v93
    %v117 = vunpack.c.l.b16 %v94
    %v118 = vunpack.c.l.b16 %v95
    %v119 = vunpack.c.l.b16 %v96
    %v120 = vunpack.c.l.b16 %v97
    %v121 = vunpack.c.l.b16 %v98
    %v122 = vunpack.c.l.b16 %v99
    %v123 = vunpack.c.l.b16 %v100
    %v124 = vpack.c.b16 %v117, %v116
    %v125 = vpack.c.b16 %v119, %v118
    %v126 = vpack.c.b16 %v121, %v120
    %v127 = vpack.c.b16 %v123, %v122
    %vm132 = vcmask 523264
    %v134 = vsel %vm132, %v92, 0
    %136 = vmatprep.subr.bf16.mxu0 0
    %137 = vmatpush1.bf16.msra.mxu0 0
    %138 = vmatprep.subr.bf16.mxu0 0
    %139 = vmatpush1.bf16.msra.mxu0 0
    %140 = vmatprep.subr.bf16.mxu0 0
    %141 = vmatpush1.bf16.msra.mxu0 0
    %142 = vmatprep.subr.bf16.mxu0 0
    %143 = vmatpush1.bf16.msra.mxu0 0
    %144 = vmatprep.subr.bf16.mxu0 0
    %145 = vmatpush1.bf16.msra.mxu0 %v127
    %146 = vmatprep.subr.bf16.mxu0 0
    %147 = vmatpush1.bf16.msra.mxu0 %v126
    %148 = vmatprep.subr.bf16.mxu0 0
    %149 = vmatpush1.bf16.msra.mxu0 %v125
    %150 = vmatprep.subr.bf16.mxu0 0
    %151 = vmatpush1.bf16.msra.mxu0 %v124
    %152 = vmatprep.subr.bf16.mxu0 0
    %153 = vmatpush2.bf16.msra.mxu0 0
    %154 = vmatprep.subr.bf16.mxu0 0
    %155 = vmatpush2.bf16.msra.mxu0 0
    %156 = vmatprep.subr.bf16.mxu0 0
    %157 = vmatpush2.bf16.msra.mxu0 0
    %158 = vmatprep.subr.bf16.mxu0 0
    %159 = vmatpush2.bf16.msra.mxu0 0
    %160 = vmatprep.subr.bf16.mxu0 0
    %161 = vmatpush2.bf16.msra.mxu0 0
    %162 = vmatprep.subr.bf16.mxu0 0
    %163 = vmatpush2.bf16.msra.mxu0 0
    %164 = vmatprep.subr.bf16.mxu0 0
    %165 = vmatpush2.bf16.msra.mxu0 0
    %166 = vmatprep.subr.bf16.mxu0 0
    %167 = vmatpush2.bf16.msra.mxu0 0
    %168 = vmatprep.mubr.bf16.mxu0 0
    %169 = vmatmul.mubr.bf16.gmra.mxu0 %v134
    %v170 = vpop.f32.mrf.mxu0
    %v171 = vadd.f32 %v106, %v170
    %v172 = vpop.f32.mrf.mxu0
    %v173 = vpop.f32.mrf.mxu0
    %v174 = vpop.f32.mrf.mxu0
    %175 = vdwg.mxu0
    %vm176 = vcmask 130048
    %177 = vst.msk [vmem:[#allocation2] sm:$0xff] %vm176, %v171
    // Predicated region
    $region22: #{net_forward.1} parent=1 // pred_check
      _
    $region23: #{net_forward.1} parent=1 // pred_check_branch
      %179 = sbr.rel (0) target = $region25
    $region24: #{net_forward.1} parent=1 // pred_region
      %s181 = ssub.s32 128, 128
      %182 = vsyncadd [#allocation3], %s181
      %s184 = sshll.u32 [#allocation2], 4
      %s185 = int_to_ptr.vmem [resolvable:$true] %s184
      %187 = dma.vmem_to_hbm [thread:$0]  %s185, 128, %s5, [#allocation3]
    $region25: #{net_forward.1} parent=1 // pred_fallthru
      _
    // Predicated region
    $region26: #{net_forward.1} parent=1 // pred_check
      _
    $region27: #{net_forward.1} parent=1 // pred_check_branch
      %189 = sbr.rel (0) target = $region29
    $region28: #{net_forward.1} parent=1 // pred_region
      %190 = dma.done [#allocation3], 128
    $region29: #{net_forward.1} parent=1 // pred_fallthru
      _
    %191 = vsyncpa [#allocation3], 1

</llo_original>
